<compile_context>
chip_gen: v5e
topology: v5e:2x2
jax: 0.10.0
libtpu: 0.0.40
codegen_flags: <defaults>
</compile_context>

<pallas_src>
import functools

import jax
import jax.numpy as jnp
from jax.experimental import pallas as pl
from jax.experimental.pallas import tpu as pltpu


def _round_up(v, m):
    return (v + m - 1) // m * m


def sage_conv_kernel(adj_ref, xk_ref, xr_ref, invdeg_ref, wl_ref, wr_ref, b_ref,
                     o_ref, acc_ref, *, residual):
    """Row x reduction tiled SAGEConv; accumulate neighbor sums over k, finalize on last k."""
    k = pl.program_id(1)

    @pl.when(k == 0)
    def _():
        acc_ref[...] = jnp.zeros_like(acc_ref)

    # Unnormalized neighbor sum: int8 counts -> bf16 right after DMA (VPU convert
    # hides under MXU/DMA), bf16 MXU with f32 accumulate.
    adj = adj_ref[...].astype(jnp.bfloat16)                      # [tm, tk]
    acc_ref[...] += jnp.dot(adj, xk_ref[...],
                            preferred_element_type=jnp.float32)  # [tm, Dp_in] f32

    @pl.when(k == pl.num_programs(1) - 1)
    def _():
        # Mean aggregation: exact-integer counts scaled by f32 1/deg.
        agg = acc_ref[...] * invdeg_ref[...]                     # [tm, Dp_in] f32
        x_row = xr_ref[...]                                      # [tm, Dp_in] bf16
        h = jnp.dot(agg.astype(jnp.bfloat16), wl_ref[...],
                    preferred_element_type=jnp.float32)
        h = h + jnp.dot(x_row, wr_ref[...],
                        preferred_element_type=jnp.float32)
        h = h + b_ref[...]
        if residual:
            h = h + x_row.astype(jnp.float32)
        o_ref[...] = h.astype(o_ref.dtype)


def sage_conv_layer(x, edge_index, w_l, w_r, bias, *,
                    residual=True, drop_prob=0.0, tm=512, tk=2048):
    """SAGEConv layer forward.

    x:          [N, D_in]   float32 node features
    edge_index: [2, E]      int32, row 0 = source j, row 1 = target i
    w_l, w_r:   [D_in, D_out]  (pre-transposed vs. torch.nn.Linear.weight)
    bias:       [D_out]
    """
    assert drop_prob == 0.0  # TODO(synk): dropout not implemented (config uses 0.0)
    n, d_in = x.shape
    d_out = w_l.shape[1]
    assert (not residual) or d_in == d_out

    # ---- tile / padding selection -------------------------------------------------
    d_in_pad = _round_up(d_in, 128)
    d_out_pad = _round_up(d_out, 128)

    n_128 = _round_up(n, 128)
    tm = min(tm, n_128)                          # multiple of 128
    tk = _round_up(min(tk, n_128), tm)           # multiple of tm (keeps tk large)
    n_pad = _round_up(n_128, tk)                 # pad N up instead of shrinking tk
    if n_pad // tm == 1 and n_pad >= 256:
        tm = n_pad // 2                          # grid[0] >= 2 -> both TCs on v7x
    grid = (n_pad // tm, n_pad // tk)

    # ---- glue (plain JAX, O(N^2) int8 scatter + O(E) degree) ----------------------
    src = edge_index[0].astype(jnp.int32)
    dst = edge_index[1].astype(jnp.int32)
    # Exact integer edge counts scattered directly into int8 storage.
    # TODO(synk): >127 duplicate edges between one (dst, src) pair overflows int8.
    adj = jnp.zeros((n_pad, n_pad), jnp.int8).at[dst, src].add(
        jnp.ones_like(dst, jnp.int8))
    deg = jnp.zeros((n_pad,), jnp.float32).at[dst].add(1.0)
    inv_deg = (1.0 / jnp.maximum(deg, 1.0)).reshape(n_pad, 1)

    x_bf16 = jnp.zeros((n_pad, d_in_pad), jnp.bfloat16).at[:n, :d_in].set(
        x.astype(jnp.bfloat16))

    wl_p = jnp.zeros((d_in_pad, d_out_pad), jnp.bfloat16).at[:d_in, :d_out].set(
        w_l.astype(jnp.bfloat16))
    wr_p = jnp.zeros((d_in_pad, d_out_pad), jnp.bfloat16).at[:d_in, :d_out].set(
        w_r.astype(jnp.bfloat16))
    bias2d = jnp.zeros((1, d_out_pad), jnp.float32).at[0, :d_out].set(
        bias.astype(jnp.float32))

    # ---- VMEM budget (double-buffered inputs/output + scratch) --------------------
    est = (2 * (tm * tk * 1                       # adjacency tile (int8)
                + tk * d_in_pad * 2               # neighbor-feature tile (bf16)
                + tm * d_in_pad * 2               # x row block (bf16)
                + tm * 4                          # inv_deg
                + 2 * d_in_pad * d_out_pad * 2    # W_l + W_r (bf16)
                + d_out_pad * 4)                  # bias
           + 2 * tm * d_out_pad * 4               # output tile (f32)
           + tm * d_in_pad * 4)                   # accumulator scratch (f32)
    vmem_limit = None
    if est > (12 << 20):
        vmem_limit = min(int(est * 1.5) + (2 << 20), 48 << 20)

    kernel = functools.partial(sage_conv_kernel, residual=residual)

    out = pl.pallas_call(
        kernel,
        out_shape=jax.ShapeDtypeStruct((n_pad, d_out_pad), jnp.float32),
        grid_spec=pltpu.PrefetchScalarGridSpec(
            num_scalar_prefetch=0,
            grid=grid,
            in_specs=[
                # adjacency tile (int8 counts): the hot HBM stream
                pl.BlockSpec((tm, tk), lambda i, k: (i, k)),
                # neighbor-feature tile for the reduction: varies with k only
                pl.BlockSpec((tk, d_in_pad), lambda i, k: (k, 0)),
                # row block of x (lin_r input + residual): constant across k
                pl.BlockSpec((tm, d_in_pad), lambda i, k: (i, 0)),
                # per-row 1/deg (f32): constant across k
                pl.BlockSpec((tm, 1), lambda i, k: (i, 0)),
                # weights + bias: grid-constant -> DMAed once
                pl.BlockSpec((d_in_pad, d_out_pad), lambda i, k: (0, 0)),
                pl.BlockSpec((d_in_pad, d_out_pad), lambda i, k: (0, 0)),
                pl.BlockSpec((1, d_out_pad), lambda i, k: (0, 0)),
            ],
            out_specs=pl.BlockSpec((tm, d_out_pad), lambda i, k: (i, 0)),
            scratch_shapes=[
                pltpu.VMEM((tm, d_in_pad), jnp.float32),     # neighbor-sum accumulator
            ]),
        compiler_params=pltpu.CompilerParams(
            dimension_semantics=("parallel", "arbitrary"),
            vmem_limit_bytes=vmem_limit),
    )(adj, x_bf16, x_bf16, inv_deg, wl_p, wr_p, bias2d)

    return out[:n, :d_out]


def reference(x, edge_index, w_l, w_r, bias, *, residual=True):
    n = x.shape[0]
    src, dst = edge_index[0], edge_index[1]
    adj = jnp.zeros((n, n), jnp.float32).at[dst, src].add(1.0)
    deg = adj.sum(axis=1, keepdims=True)
    adj = adj / jnp.maximum(deg, 1.0)
    agg = adj @ x
    out = agg @ w_l + x @ w_r + bias[None, :]
    if residual:
        out = out + x
    return out


if __name__ == "__main__":
    def run_case(n, d, e, **tile_kw):
        key = jax.random.PRNGKey(0)
        kx, ke1, ke2, kwl, kwr, kb = jax.random.split(key, 6)
        x = jax.random.normal(kx, (n, d), jnp.float32)
        edge_index = jnp.stack([
            jax.random.randint(ke1, (e,), 0, n, jnp.int32),    # sources
            jax.random.randint(ke2, (e,), 0, n, jnp.int32),    # targets
        ], axis=0)
        scale = 1.0 / jnp.sqrt(jnp.float32(d))
        w_l = jax.random.uniform(kwl, (d, d), jnp.float32, -1.0, 1.0) * scale
        w_r = jax.random.uniform(kwr, (d, d), jnp.float32, -1.0, 1.0) * scale
        bias = jax.random.uniform(kb, (d,), jnp.float32, -1.0, 1.0) * scale

        out = sage_conv_layer(x, edge_index, w_l, w_r, bias,
                              residual=True, drop_prob=0.0, **tile_kw)
        out = jax.block_until_ready(out)
        ref = reference(x, edge_index, w_l, w_r, bias, residual=True)
        assert out.shape == (n, d)
        # bf16 MXU operands (f32 accumulate, exact int adjacency) -> relaxed tolerance
        assert jnp.allclose(out, ref, atol=3e-2, rtol=3e-2), (
            f"mismatch vs. JAX reference, max abs err "
            f"{float(jnp.max(jnp.abs(out - ref)))}")

    # Small deterministic problem: N=64 nodes, D=32, E=256 (single 128x128 tile).
    run_case(64, 32, 256)
    # N=300 -> pads to 384, tm halved to 192 -> exercises the multi-row-block grid.
    run_case(300, 32, 2000)
    # Same graph with explicit small tiles -> exercises the k-reduction / accumulator.
    run_case(300, 32, 2000, tm=128, tk=128)

    print("KERNEL_OK")
</pallas_src>

<mosaic_0001>
module attributes {stable_mosaic.version = 11 : i64} {
  func.func @sage_conv_kernel(%arg0: i32, %arg1: i32, %arg2: memref<128x128xi8, #tpu.memory_space<vmem>>, %arg3: memref<128x128xbf16, #tpu.memory_space<vmem>>, %arg4: memref<128x128xbf16, #tpu.memory_space<vmem>>, %arg5: memref<128x1xf32, #tpu.memory_space<vmem>>, %arg6: memref<128x128xbf16, #tpu.memory_space<vmem>>, %arg7: memref<128x128xbf16, #tpu.memory_space<vmem>>, %arg8: memref<1x128xf32, #tpu.memory_space<vmem>>, %arg9: memref<128x128xf32, #tpu.memory_space<vmem>>, %arg10: memref<128x128xf32, #tpu.memory_space<vmem>>) attributes {dimension_semantics = [#tpu.dimension_semantics<parallel>, #tpu.dimension_semantics<arbitrary>], iteration_bounds = array<i64: 1, 1>, scalar_prefetch = 0 : i64, scratch_operands = 1 : i64, tpu.core_type = #tpu.core_type<tc>, window_params = [{transform_indices = @transform_0, window_bounds = array<i64: 128, 128>}, {transform_indices = @transform_1, window_bounds = array<i64: 128, 128>}, {transform_indices = @transform_2, window_bounds = array<i64: 128, 128>}, {transform_indices = @transform_3, window_bounds = array<i64: 128, 1>}, {pipeline_mode = #tpu.pipeline_mode<synchronous>, transform_indices = @transform_4, window_bounds = array<i64: 128, 128>}, {pipeline_mode = #tpu.pipeline_mode<synchronous>, transform_indices = @transform_5, window_bounds = array<i64: 128, 128>}, {pipeline_mode = #tpu.pipeline_mode<synchronous>, transform_indices = @transform_6, window_bounds = array<i64: 1, 128>}, {transform_indices = @transform_7, window_bounds = array<i64: 128, 128>}]} {
    %c0_i32 = arith.constant 0 : i32
    %0 = arith.cmpi eq, %arg1, %c0_i32 : i32
    %1 = arith.extui %0 : i1 to i32
    %c0_i32_0 = arith.constant 0 : i32
    %2 = arith.cmpi ne, %1, %c0_i32_0 : i32
    scf.if %2 {
      %cst_10 = arith.constant 0.000000e+00 : f32
      %13 = vector.broadcast %cst_10 : f32 to vector<128x128xf32>
      %c0_11 = arith.constant 0 : index
      %c0_12 = arith.constant 0 : index
      %14 = vector.load %arg10[%c0_11, %c0_12] : memref<128x128xf32, #tpu.memory_space<vmem>>, vector<128x128xf32>
      tpu.vector_store %arg10[%c0_11, %c0_12], %13 {strides = array<i32>} : memref<128x128xf32, #tpu.memory_space<vmem>>, vector<128x128xf32>,
    } else {
    }
    %c0 = arith.constant 0 : index
    %c0_1 = arith.constant 0 : index
    %3 = vector.load %arg2[%c0, %c0_1] : memref<128x128xi8, #tpu.memory_space<vmem>>, vector<128x128xi8>
    %4 = arith.sitofp %3 : vector<128x128xi8> to vector<128x128xbf16>
    %c0_2 = arith.constant 0 : index
    %c0_3 = arith.constant 0 : index
    %5 = vector.load %arg10[%c0_2, %c0_3] : memref<128x128xf32, #tpu.memory_space<vmem>>, vector<128x128xf32>
    %c0_4 = arith.constant 0 : index
    %c0_5 = arith.constant 0 : index
    %6 = vector.load %arg3[%c0_4, %c0_5] : memref<128x128xbf16, #tpu.memory_space<vmem>>, vector<128x128xbf16>
    %cst = arith.constant dense<0.000000e+00> : vector<128x128xf32>
    %7 = tpu.matmul %4, %6, %cst {dimension_numbers = #tpu.dot_dimension_numbers<[1], [0], [0], [1], [0, 0, 1, 1], [], []>} : vector<128x128xbf16>, vector<128x128xbf16>, vector<128x128xf32> -> vector<128x128xf32>
    %8 = arith.addf %5, %7 : vector<128x128xf32>
    %c0_6 = arith.constant 0 : index
    %c0_7 = arith.constant 0 : index
    %9 = vector.load %arg10[%c0_6, %c0_7] : memref<128x128xf32, #tpu.memory_space<vmem>>, vector<128x128xf32>
    tpu.vector_store %arg10[%c0_6, %c0_7], %8 {strides = array<i32>} : memref<128x128xf32, #tpu.memory_space<vmem>>, vector<128x128xf32>,
    %c0_i32_8 = arith.constant 0 : i32
    %10 = arith.cmpi eq, %arg1, %c0_i32_8 : i32
    %11 = arith.extui %10 : i1 to i32
    %c0_i32_9 = arith.constant 0 : i32
    %12 = arith.cmpi ne, %11, %c0_i32_9 : i32
    scf.if %12 {
      %c0_10 = arith.constant 0 : index
      %c0_11 = arith.constant 0 : index
      %13 = vector.load %arg10[%c0_10, %c0_11] : memref<128x128xf32, #tpu.memory_space<vmem>>, vector<128x128xf32>
      %c0_12 = arith.constant 0 : index
      %c0_13 = arith.constant 0 : index
      %14 = vector.load %arg5[%c0_12, %c0_13] : memref<128x1xf32, #tpu.memory_space<vmem>>, vector<128x1xf32>
      %15 = vector.broadcast %14 : vector<128x1xf32> to vector<128x128xf32>
      %16 = arith.mulf %13, %15 : vector<128x128xf32>
      %c0_14 = arith.constant 0 : index
      %c0_15 = arith.constant 0 : index
      %17 = vector.load %arg4[%c0_14, %c0_15] : memref<128x128xbf16, #tpu.memory_space<vmem>>, vector<128x128xbf16>
      %18 = arith.truncf %16 : vector<128x128xf32> to vector<128x128xbf16>
      %c0_16 = arith.constant 0 : index
      %c0_17 = arith.constant 0 : index
      %19 = vector.load %arg6[%c0_16, %c0_17] : memref<128x128xbf16, #tpu.memory_space<vmem>>, vector<128x128xbf16>
      %cst_18 = arith.constant dense<0.000000e+00> : vector<128x128xf32>
      %20 = tpu.matmul %18, %19, %cst_18 {dimension_numbers = #tpu.dot_dimension_numbers<[1], [0], [0], [1], [0, 0, 1, 1], [], []>} : vector<128x128xbf16>, vector<128x128xbf16>, vector<128x128xf32> -> vector<128x128xf32>
      %c0_19 = arith.constant 0 : index
      %c0_20 = arith.constant 0 : index
      %21 = vector.load %arg7[%c0_19, %c0_20] : memref<128x128xbf16, #tpu.memory_space<vmem>>, vector<128x128xbf16>
      %cst_21 = arith.constant dense<0.000000e+00> : vector<128x128xf32>
      %22 = tpu.matmul %17, %21, %cst_21 {dimension_numbers = #tpu.dot_dimension_numbers<[1], [0], [0], [1], [0, 0, 1, 1], [], []>} : vector<128x128xbf16>, vector<128x128xbf16>, vector<128x128xf32> -> vector<128x128xf32>
      %23 = arith.addf %20, %22 : vector<128x128xf32>
      %c0_22 = arith.constant 0 : index
      %c0_23 = arith.constant 0 : index
      %24 = vector.load %arg8[%c0_22, %c0_23] : memref<1x128xf32, #tpu.memory_space<vmem>>, vector<1x128xf32>
      %25 = vector.broadcast %24 : vector<1x128xf32> to vector<128x128xf32>
      %26 = arith.addf %23, %25 : vector<128x128xf32>
      %27 = arith.extf %17 : vector<128x128xbf16> to vector<128x128xf32>
      %28 = arith.addf %26, %27 : vector<128x128xf32>
      %c0_24 = arith.constant 0 : index
      %c0_25 = arith.constant 0 : index
      %29 = vector.load %arg9[%c0_24, %c0_25] : memref<128x128xf32, #tpu.memory_space<vmem>>, vector<128x128xf32>
      tpu.vector_store %arg9[%c0_24, %c0_25], %28 {strides = array<i32>} : memref<128x128xf32, #tpu.memory_space<vmem>>, vector<128x128xf32>,
    } else {
    }
    return
  }
  func.func @transform_0(%arg0: i32, %arg1: i32) -> (i32, i32) {
    %c0_i32 = arith.constant 0 : i32
    return %arg0, %arg1 : i32, i32
  }
  func.func @transform_1(%arg0: i32, %arg1: i32) -> (i32, i32) {
    %c0_i32 = arith.constant 0 : i32
    %c0_i32_0 = arith.constant 0 : i32
    return %arg1, %c0_i32 : i32, i32
  }
  func.func @transform_2(%arg0: i32, %arg1: i32) -> (i32, i32) {
    %c0_i32 = arith.constant 0 : i32
    %c0_i32_0 = arith.constant 0 : i32
    return %arg0, %c0_i32 : i32, i32
  }
  func.func @transform_3(%arg0: i32, %arg1: i32) -> (i32, i32) {
    %c0_i32 = arith.constant 0 : i32
    %c0_i32_0 = arith.constant 0 : i32
    return %arg0, %c0_i32 : i32, i32
  }
  func.func @transform_4(%arg0: i32, %arg1: i32) -> (i32, i32) {
    %c0_i32 = arith.constant 0 : i32
    %c0_i32_0 = arith.constant 0 : i32
    %c0_i32_1 = arith.constant 0 : i32
    return %c0_i32, %c0_i32_0 : i32, i32
  }
  func.func @transform_5(%arg0: i32, %arg1: i32) -> (i32, i32) {
    %c0_i32 = arith.constant 0 : i32
    %c0_i32_0 = arith.constant 0 : i32
    %c0_i32_1 = arith.constant 0 : i32
    return %c0_i32, %c0_i32_0 : i32, i32
  }
  func.func @transform_6(%arg0: i32, %arg1: i32) -> (i32, i32) {
    %c0_i32 = arith.constant 0 : i32
    %c0_i32_0 = arith.constant 0 : i32
    %c0_i32_1 = arith.constant 0 : i32
    return %c0_i32, %c0_i32_0 : i32, i32
  }
  func.func @transform_7(%arg0: i32, %arg1: i32) -> (i32, i32) {
    %c0_i32 = arith.constant 0 : i32
    %c0_i32_0 = arith.constant 0 : i32
    return %arg0, %c0_i32 : i32, i32
  }
}

</mosaic_0001>

<llo_original>
// kernel: tpu_custom_call.1
$region0: #{tpu_custom_call.1}
  #allocation0 [shape = 'u32[]', space=smem, size = 0x4, offset = 0x4, fixed_abs, tag = 'smem constant byte address 0x4 - core index']
  #allocation1 [shape = 'u32[72,128]{1,0:T(1,128)}', space=vmem, size = 0x9000, scoped, tag = 'internal scratch']
  #allocation2 [shape = 'f32[128,128]{1,0:T(8,128)}', space=vmem, size = 0x10000, scoped, tag = 'scratch operand']
  %s0 = inlined_call_operand.hbm [shape: s8[128,128], index: 0, kind: input, shape index: {}]
  %s1 = inlined_call_operand.vmem [shape: bf16[128,128], index: 1, kind: input, shape index: {}]
  %s2 = inlined_call_operand.vmem [shape: bf16[128,128], index: 2, kind: input, shape index: {}]
  %s3 = inlined_call_operand.vmem [shape: f32[128,1], index: 3, kind: input, shape index: {}]
  %s4 = inlined_call_operand.hbm [shape: bf16[128,128], index: 4, kind: input, shape index: {}]
  %s5 = inlined_call_operand.hbm [shape: bf16[128,128], index: 5, kind: input, shape index: {}]
  %s6 = inlined_call_operand.vmem [shape: f32[1,128], index: 6, kind: input, shape index: {}]
  %s7 = inlined_call_operand.hbm [shape: f32[128,128], index: 7, kind: output, shape index: {}]
  %s8 = sld [smem:[#allocation0]]
  $region58: #{tpu_custom_call.1} parent=0
    _
  %s10 = ssub.s32 1, %s8
  %s11 = scalar_select 0, %s10, %s8
  $region1: #{tpu_custom_call.1} parent=0
    #allocation3 [shape = 'u8[16384]{0}', space=vmem, size = 0x4000, scoped, tag = 'input window, operand 0, single buffered']
    #allocation4 [shape = 's32[1]{0}', space=sflag, size = 0x4, scoped, tag = 'scoped memory for tpu_custom_call.1']
    #allocation5 [shape = 's32[1]{0}', space=sflag, size = 0x4, scoped, tag = 'scoped memory for tpu_custom_call.1']
    #allocation6 [shape = 'u8[32768]{0}', space=vmem, size = 0x8000, scoped, tag = 'input window, operand 4, single buffered']
    #allocation7 [shape = 's32[1]{0}', space=sflag, size = 0x4, scoped, tag = 'scoped memory for tpu_custom_call.1']
    #allocation8 [shape = 'u8[32768]{0}', space=vmem, size = 0x8000, scoped, tag = 'input window, operand 5, single buffered']
    #allocation9 [shape = 'u8[65536]{0}', space=vmem, size = 0x10000, scoped, tag = 'output window, operand 0, single buffered']
    %12 = vsyncpa [#allocation4], 0
    %13 = vsyncpa [#allocation7], 0
    %14 = vsyncpa [#allocation5], 0
    // Predicated region
    $region2: #{tpu_custom_call.1} parent=1 // pred_check
      _
    $region3: #{tpu_custom_call.1} parent=1 // pred_check_branch
      %16 = sbr.rel (0) target = $region5
    $region4: #{tpu_custom_call.1} parent=1 // pred_region
      %18 = vsyncadd [#allocation4], 0
      %s19 = sshll.u32 %s0, 4
      %s20 = int_to_ptr.hbm [resolvable:$true] %s19
      %s21 = sshll.u32 [#allocation3], 4
      %s22 = int_to_ptr.vmem [resolvable:$true] %s21
      %27 = dma.hbm_to_vmem [thread:$0]  %s20, 512, %s22, [#allocation4], 128, 128, 8
    $region5: #{tpu_custom_call.1} parent=1 // pred_fallthru
      _
    // Predicated region
    $region6: #{tpu_custom_call.1} parent=1 // pred_check
      _
    $region7: #{tpu_custom_call.1} parent=1 // pred_check_branch
      %29 = sbr.rel (0) target = $region9
    $region8: #{tpu_custom_call.1} parent=1 // pred_region
      _
    $region9: #{tpu_custom_call.1} parent=1 // pred_fallthru
      _
    // Predicated region
    $region10: #{tpu_custom_call.1} parent=1 // pred_check
      _
    $region11: #{tpu_custom_call.1} parent=1 // pred_check_branch
      %31 = sbr.rel (0) target = $region13
    $region12: #{tpu_custom_call.1} parent=1 // pred_region
      _
    $region13: #{tpu_custom_call.1} parent=1 // pred_fallthru
      _
    // Predicated region
    $region14: #{tpu_custom_call.1} parent=1 // pred_check
      _
    $region15: #{tpu_custom_call.1} parent=1 // pred_check_branch
      %33 = sbr.rel (0) target = $region17
    $region16: #{tpu_custom_call.1} parent=1 // pred_region
      _
    $region17: #{tpu_custom_call.1} parent=1 // pred_fallthru
      _
    // Predicated region
    $region18: #{tpu_custom_call.1} parent=1 // pred_check
      _
    $region19: #{tpu_custom_call.1} parent=1 // pred_check_branch
      %35 = sbr.rel (0) target = $region21
    $region20: #{tpu_custom_call.1} parent=1 // pred_region
      %37 = vsyncadd [#allocation7], 0
      %s38 = sshll.u32 %s4, 4
      %s39 = int_to_ptr.hbm [resolvable:$true] %s38
      %s40 = sshll.u32 [#allocation6], 4
      %s41 = int_to_ptr.vmem [resolvable:$true] %s40
      %46 = dma.hbm_to_vmem [thread:$0]  %s39, 1024, %s41, [#allocation7], 64, 64, 4
    $region21: #{tpu_custom_call.1} parent=1 // pred_fallthru
      _
    // Predicated region
    $region22: #{tpu_custom_call.1} parent=1 // pred_check
      _
    $region23: #{tpu_custom_call.1} parent=1 // pred_check_branch
      %48 = sbr.rel (0) target = $region25
    $region24: #{tpu_custom_call.1} parent=1 // pred_region
      %50 = vsyncadd [#allocation7], 0
      %s51 = sshll.u32 %s5, 4
      %s52 = int_to_ptr.hbm [resolvable:$true] %s51
      %s53 = sshll.u32 [#allocation8], 4
      %s54 = int_to_ptr.vmem [resolvable:$true] %s53
      %59 = dma.hbm_to_vmem [thread:$0]  %s52, 1024, %s54, [#allocation7], 64, 64, 4
    $region25: #{tpu_custom_call.1} parent=1 // pred_fallthru
      _
    // Predicated region
    $region26: #{tpu_custom_call.1} parent=1 // pred_check
      _
    $region27: #{tpu_custom_call.1} parent=1 // pred_check_branch
      %61 = sbr.rel (0) target = $region29
    $region28: #{tpu_custom_call.1} parent=1 // pred_region
      _
    $region29: #{tpu_custom_call.1} parent=1 // pred_fallthru
      _
    // Predicated region
    $region30: #{tpu_custom_call.1} parent=1 // pred_check
      _
    $region31: #{tpu_custom_call.1} parent=1 // pred_check_branch
      %63 = sbr.rel (0) target = $region33
    $region32: #{tpu_custom_call.1} parent=1 // pred_region
      %65 = dma.done [#allocation4], 512
    $region33: #{tpu_custom_call.1} parent=1 // pred_fallthru
      _
    // Predicated region
    $region34: #{tpu_custom_call.1} parent=1 // pred_check
      _
    $region35: #{tpu_custom_call.1} parent=1 // pred_check_branch
      %67 = sbr.rel (0) target = $region37
    $region36: #{tpu_custom_call.1} parent=1 // pred_region
      %69 = dma.done [#allocation7], 1024
    $region37: #{tpu_custom_call.1} parent=1 // pred_fallthru
      _
    // Predicated region
    $region38: #{tpu_custom_call.1} parent=1 // pred_check
      _
    $region39: #{tpu_custom_call.1} parent=1 // pred_check_branch
      %71 = sbr.rel (0) target = $region41
    $region40: #{tpu_custom_call.1} parent=1 // pred_region
      %73 = dma.done [#allocation7], 1024
    $region41: #{tpu_custom_call.1} parent=1 // pred_fallthru
      _
    %p74 = scmp.eq.s32.totalorder 0, 0
    // Predicated region
    $region42: #{tpu_custom_call.1} parent=1 // pred_check
      %p75 = pneg %p74
    $region43: #{tpu_custom_call.1} parent=1 // pred_check_branch
      %77 = sbr.rel (%p75) target = $region45
    $region44: #{tpu_custom_call.1} parent=1 // pred_region
      %78 = vst [vmem:[#allocation2] sm:$0xff] 0.0
      %79 = vst [vmem:[#allocation2 + $0x8] sm:$0xff] 0.0
      %80 = vst [vmem:[#allocation2 + $0x10] sm:$0xff] 0.0
      %81 = vst [vmem:[#allocation2 + $0x18] sm:$0xff] 0.0
      %82 = vst [vmem:[#allocation2 + $0x20] sm:$0xff] 0.0
      %83 = vst [vmem:[#allocation2 + $0x28] sm:$0xff] 0.0
      %84 = vst [vmem:[#allocation2 + $0x30] sm:$0xff] 0.0
      %85 = vst [vmem:[#allocation2 + $0x38] sm:$0xff] 0.0
      %86 = vst [vmem:[#allocation2 + $0x40] sm:$0xff] 0.0
      %87 = vst [vmem:[#allocation2 + $0x48] sm:$0xff] 0.0
      %88 = vst [vmem:[#allocation2 + $0x50] sm:$0xff] 0.0
      %89 = vst [vmem:[#allocation2 + $0x58] sm:$0xff] 0.0
      %90 = vst [vmem:[#allocation2 + $0x60] sm:$0xff] 0.0
      %91 = vst [vmem:[#allocation2 + $0x68] sm:$0xff] 0.0
      %92 = vst [vmem:[#allocation2 + $0x70] sm:$0xff] 0.0
      %93 = vst [vmem:[#allocation2 + $0x78] sm:$0xff] 0.0
    $region45: #{tpu_custom_call.1} parent=1 // pred_fallthru
      _
    %v94 = vld [vmem:[#allocation3] sm:$0xff]
    %v95 = vld [vmem:[#allocation3 + $0x8] sm:$0xff]
    %v96 = vld [vmem:[#allocation3 + $0x10] sm:$0xff]
    %v97 = vld [vmem:[#allocation3 + $0x18] sm:$0xff]
    %v98 = vunpack.c.0.s8 %v94
    %v99 = vunpack.c.1.s8 %v94
    %v100 = vunpack.c.2.s8 %v94
    %v101 = vunpack.c.3.s8 %v94
    %v102 = vunpack.c.0.s8 %v95
    %v103 = vunpack.c.1.s8 %v95
    %v104 = vunpack.c.2.s8 %v95
    %v105 = vunpack.c.3.s8 %v95
    %v106 = vunpack.c.0.s8 %v96
    %v107 = vunpack.c.1.s8 %v96
    %v108 = vunpack.c.2.s8 %v96
    %v109 = vunpack.c.3.s8 %v96
    %v110 = vunpack.c.0.s8 %v97
    %v111 = vunpack.c.1.s8 %v97
    %v112 = vunpack.c.2.s8 %v97
    %v113 = vunpack.c.3.s8 %v97
    %v114 = vcvt.s32.f32 %v98
    %v115 = vcvt.s32.f32 %v99
    %v116 = vcvt.s32.f32 %v100
    %v117 = vcvt.s32.f32 %v101
    %v118 = vcvt.s32.f32 %v102
    %v119 = vcvt.s32.f32 %v103
    %v120 = vcvt.s32.f32 %v104
    %v121 = vcvt.s32.f32 %v105
    %v122 = vcvt.s32.f32 %v106
    %v123 = vcvt.s32.f32 %v107
    %v124 = vcvt.s32.f32 %v108
    %v125 = vcvt.s32.f32 %v109
    %v126 = vcvt.s32.f32 %v110
    %v127 = vcvt.s32.f32 %v111
    %v128 = vcvt.s32.f32 %v112
    %v129 = vcvt.s32.f32 %v113
    %v130 = vpack.c.bf16 %v115, %v114
    %v131 = vpack.c.bf16 %v117, %v116
    %v132 = vpack.c.bf16 %v119, %v118
    %v133 = vpack.c.bf16 %v121, %v120
    %v134 = vpack.c.bf16 %v123, %v122
    %v135 = vpack.c.bf16 %v125, %v124
    %v136 = vpack.c.bf16 %v127, %v126
    %v137 = vpack.c.bf16 %v129, %v128
    %v138 = vld [vmem:[#allocation2] sm:$0xff]
    %v139 = vld [vmem:[#allocation2 + $0x8] sm:$0xff]
    %v140 = vld [vmem:[#allocation2 + $0x10] sm:$0xff]
    %v141 = vld [vmem:[#allocation2 + $0x18] sm:$0xff]
    %v142 = vld [vmem:[#allocation2 + $0x20] sm:$0xff]
    %v143 = vld [vmem:[#allocation2 + $0x28] sm:$0xff]
    %v144 = vld [vmem:[#allocation2 + $0x30] sm:$0xff]
    %v145 = vld [vmem:[#allocation2 + $0x38] sm:$0xff]
    %v146 = vld [vmem:[#allocation2 + $0x40] sm:$0xff]
    %v147 = vld [vmem:[#allocation2 + $0x48] sm:$0xff]
    %v148 = vld [vmem:[#allocation2 + $0x50] sm:$0xff]
    %v149 = vld [vmem:[#allocation2 + $0x58] sm:$0xff]
    %v150 = vld [vmem:[#allocation2 + $0x60] sm:$0xff]
    %v151 = vld [vmem:[#allocation2 + $0x68] sm:$0xff]
    %v152 = vld [vmem:[#allocation2 + $0x70] sm:$0xff]
    %v153 = vld [vmem:[#allocation2 + $0x78] sm:$0xff]
    %v154 = vld [vmem:[%s1] sm:$0xf]
    %v155 = vld [vmem:[%s1 + $0x4] sm:$0xf]
    %v156 = vld [vmem:[%s1 + $0x8] sm:$0xf]
    %v157 = vld [vmem:[%s1 + $0xc] sm:$0xf]
    %v158 = vld [vmem:[%s1 + $0x10] sm:$0xf]
    %v159 = vld [vmem:[%s1 + $0x14] sm:$0xf]
    %v160 = vld [vmem:[%s1 + $0x18] sm:$0xf]
    %v161 = vld [vmem:[%s1 + $0x1c] sm:$0xf]
    %v162 = vld [vmem:[%s1 + $0x20] sm:$0xf]
    %v163 = vld [vmem:[%s1 + $0x24] sm:$0xf]
    %v164 = vld [vmem:[%s1 + $0x28] sm:$0xf]
    %v165 = vld [vmem:[%s1 + $0x2c] sm:$0xf]
    %v166 = vld [vmem:[%s1 + $0x30] sm:$0xf]
    %v167 = vld [vmem:[%s1 + $0x34] sm:$0xf]
    %v168 = vld [vmem:[%s1 + $0x38] sm:$0xf]
    %v169 = vld [vmem:[%s1 + $0x3c] sm:$0xf]
    %v186 = vunpack.c.l.b16 %v154
    %v187 = vunpack.c.l.b16 %v155
    %v188 = vunpack.c.l.b16 %v156
    %v189 = vunpack.c.l.b16 %v157
    %v190 = vunpack.c.l.b16 %v158
    %v191 = vunpack.c.l.b16 %v159
    %v192 = vunpack.c.l.b16 %v160
    %v193 = vunpack.c.l.b16 %v161
    %v194 = vunpack.c.l.b16 %v162
    %v195 = vunpack.c.l.b16 %v163
    %v196 = vunpack.c.l.b16 %v164
    %v197 = vunpack.c.l.b16 %v165
    %v198 = vunpack.c.l.b16 %v166
    %v199 = vunpack.c.l.b16 %v167
    %v200 = vunpack.c.l.b16 %v168
    %v201 = vunpack.c.l.b16 %v169
    %v202 = vpack.c.b16 %v187, %v186
    %v203 = vpack.c.b16 %v189, %v188
    %v204 = vpack.c.b16 %v191, %v190
    %v205 = vpack.c.b16 %v193, %v192
    %v206 = vpack.c.b16 %v195, %v194
    %v207 = vpack.c.b16 %v197, %v196
    %v208 = vpack.c.b16 %v199, %v198
    %v209 = vpack.c.b16 %v201, %v200
    %218 = vmatpush.bf16.msra.mxu0 %v209
    %219 = vmatpush.bf16.msra.mxu0 %v208
    %220 = vmatpush.bf16.msra.mxu0 %v207
    %221 = vmatpush.bf16.msra.mxu0 %v206
    %222 = vmatpush.bf16.msra.mxu0 %v205
    %223 = vmatpush.bf16.msra.mxu0 %v204
    %224 = vmatpush.bf16.msra.mxu0 %v203
    %225 = vmatpush.bf16.msra.mxu0 %v202
    %226 = vmatmul.bf16.gmra.mxu0 %v130
    %v227 = vpop.f32.mrf.mxu0
    %v228 = vadd.f32 0.0, %v227
    %v229 = vpop.f32.mrf.mxu0
    %v230 = vadd.f32 0.0, %v229
    %231 = vmatmul.bf16.gmra.mxu0 %v131
    %v232 = vpop.f32.mrf.mxu0
    %v233 = vadd.f32 0.0, %v232
    %v234 = vpop.f32.mrf.mxu0
    %v235 = vadd.f32 0.0, %v234
    %236 = vmatmul.bf16.gmra.mxu0 %v132
    %v237 = vpop.f32.mrf.mxu0
    %v238 = vadd.f32 0.0, %v237
    %v239 = vpop.f32.mrf.mxu0
    %v240 = vadd.f32 0.0, %v239
    %241 = vmatmul.bf16.gmra.mxu0 %v133
    %v242 = vpop.f32.mrf.mxu0
    %v243 = vadd.f32 0.0, %v242
    %v244 = vpop.f32.mrf.mxu0
    %v245 = vadd.f32 0.0, %v244
    %246 = vmatmul.bf16.gmra.mxu0 %v134
    %v247 = vpop.f32.mrf.mxu0
    %v248 = vadd.f32 0.0, %v247
    %v249 = vpop.f32.mrf.mxu0
    %v250 = vadd.f32 0.0, %v249
    %251 = vmatmul.bf16.gmra.mxu0 %v135
    %v252 = vpop.f32.mrf.mxu0
    %v253 = vadd.f32 0.0, %v252
    %v254 = vpop.f32.mrf.mxu0
    %v255 = vadd.f32 0.0, %v254
    %256 = vmatmul.bf16.gmra.mxu0 %v136
    %v257 = vpop.f32.mrf.mxu0
    %v258 = vadd.f32 0.0, %v257
    %v259 = vpop.f32.mrf.mxu0
    %v260 = vadd.f32 0.0, %v259
    %261 = vmatmul.bf16.gmra.mxu0 %v137
    %v262 = vpop.f32.mrf.mxu0
    %v263 = vadd.f32 0.0, %v262
    %v264 = vpop.f32.mrf.mxu0
    %v265 = vadd.f32 0.0, %v264
    %266 = vdwg.mxu0
    %v267 = vadd.f32 %v138, %v228
    %v268 = vadd.f32 %v139, %v230
    %v269 = vadd.f32 %v140, %v233
    %v270 = vadd.f32 %v141, %v235
    %v271 = vadd.f32 %v142, %v238
    %v272 = vadd.f32 %v143, %v240
    %v273 = vadd.f32 %v144, %v243
    %v274 = vadd.f32 %v145, %v245
    %v275 = vadd.f32 %v146, %v248
    %v276 = vadd.f32 %v147, %v250
    %v277 = vadd.f32 %v148, %v253
    %v278 = vadd.f32 %v149, %v255
    %v279 = vadd.f32 %v150, %v258
    %v280 = vadd.f32 %v151, %v260
    %v281 = vadd.f32 %v152, %v263
    %v282 = vadd.f32 %v153, %v265
    %283 = vst [vmem:[#allocation2] sm:$0xff] %v267
    %284 = vst [vmem:[#allocation2 + $0x8] sm:$0xff] %v268
    %285 = vst [vmem:[#allocation2 + $0x10] sm:$0xff] %v269
    %286 = vst [vmem:[#allocation2 + $0x18] sm:$0xff] %v270
    %287 = vst [vmem:[#allocation2 + $0x20] sm:$0xff] %v271
    %288 = vst [vmem:[#allocation2 + $0x28] sm:$0xff] %v272
    %289 = vst [vmem:[#allocation2 + $0x30] sm:$0xff] %v273
    %290 = vst [vmem:[#allocation2 + $0x38] sm:$0xff] %v274
    %291 = vst [vmem:[#allocation2 + $0x40] sm:$0xff] %v275
    %292 = vst [vmem:[#allocation2 + $0x48] sm:$0xff] %v276
    %293 = vst [vmem:[#allocation2 + $0x50] sm:$0xff] %v277
    %294 = vst [vmem:[#allocation2 + $0x58] sm:$0xff] %v278
    %295 = vst [vmem:[#allocation2 + $0x60] sm:$0xff] %v279
    %296 = vst [vmem:[#allocation2 + $0x68] sm:$0xff] %v280
    %297 = vst [vmem:[#allocation2 + $0x70] sm:$0xff] %v281
    %298 = vst [vmem:[#allocation2 + $0x78] sm:$0xff] %v282
    // Predicated region
    $region46: #{tpu_custom_call.1} parent=1 // pred_check
      %p299 = pneg %p74
    $region47: #{tpu_custom_call.1} parent=1 // pred_check_branch
      %301 = sbr.rel (%p299) target = $region49
    $region48: #{tpu_custom_call.1} parent=1 // pred_region
      %v302 = vld [vmem:[#allocation2] sm:$0xff]
      %v303 = vld [vmem:[#allocation2 + $0x8] sm:$0xff]
      %v304 = vld [vmem:[#allocation2 + $0x10] sm:$0xff]
      %v305 = vld [vmem:[#allocation2 + $0x18] sm:$0xff]
      %v306 = vld [vmem:[#allocation2 + $0x20] sm:$0xff]
      %v307 = vld [vmem:[#allocation2 + $0x28] sm:$0xff]
      %v308 = vld [vmem:[#allocation2 + $0x30] sm:$0xff]
      %v309 = vld [vmem:[#allocation2 + $0x38] sm:$0xff]
      %v310 = vld [vmem:[#allocation2 + $0x40] sm:$0xff]
      %v311 = vld [vmem:[#allocation2 + $0x48] sm:$0xff]
      %v312 = vld [vmem:[#allocation2 + $0x50] sm:$0xff]
      %v313 = vld [vmem:[#allocation2 + $0x58] sm:$0xff]
      %v314 = vld [vmem:[#allocation2 + $0x60] sm:$0xff]
      %v315 = vld [vmem:[#allocation2 + $0x68] sm:$0xff]
      %v316 = vld [vmem:[#allocation2 + $0x70] sm:$0xff]
      %v317 = vld [vmem:[#allocation2 + $0x78] sm:$0xff]
      %v318 = vld [vmem:[%s3] sm:$0xff]
      %v319 = vld [vmem:[%s3 + $0x8] sm:$0xff]
      %v320 = vld [vmem:[%s3 + $0x10] sm:$0xff]
      %v321 = vld [vmem:[%s3 + $0x18] sm:$0xff]
      %v322 = vld [vmem:[%s3 + $0x20] sm:$0xff]
      %v323 = vld [vmem:[%s3 + $0x28] sm:$0xff]
      %v324 = vld [vmem:[%s3 + $0x30] sm:$0xff]
      %v325 = vld [vmem:[%s3 + $0x38] sm:$0xff]
      %v326 = vld [vmem:[%s3 + $0x40] sm:$0xff]
      %v327 = vld [vmem:[%s3 + $0x48] sm:$0xff]
      %v328 = vld [vmem:[%s3 + $0x50] sm:$0xff]
      %v329 = vld [vmem:[%s3 + $0x58] sm:$0xff]
      %v330 = vld [vmem:[%s3 + $0x60] sm:$0xff]
      %v331 = vld [vmem:[%s3 + $0x68] sm:$0xff]
      %v332 = vld [vmem:[%s3 + $0x70] sm:$0xff]
      %v333 = vld [vmem:[%s3 + $0x78] sm:$0xff]
      %335 = vset.pattern.permute.xlu0 0
      %336 = vperm.xlu0 %335, %v318
      %v337 = vpop.permute.xlu0 %336
      %340 = vset.pattern.permute.xlu0 0
      %341 = vperm.xlu0 %340, %v319
      %v342 = vpop.permute.xlu0 %341
      %345 = vset.pattern.permute.xlu0 0
      %346 = vperm.xlu0 %345, %v320
      %v347 = vpop.permute.xlu0 %346
      %350 = vset.pattern.permute.xlu0 0
      %351 = vperm.xlu0 %350, %v321
      %v352 = vpop.permute.xlu0 %351
      %355 = vset.pattern.permute.xlu0 0
      %356 = vperm.xlu0 %355, %v322
      %v357 = vpop.permute.xlu0 %356
      %360 = vset.pattern.permute.xlu0 0
      %361 = vperm.xlu0 %360, %v323
      %v362 = vpop.permute.xlu0 %361
      %365 = vset.pattern.permute.xlu0 0
      %366 = vperm.xlu0 %365, %v324
      %v367 = vpop.permute.xlu0 %366
      %370 = vset.pattern.permute.xlu0 0
      %371 = vperm.xlu0 %370, %v325
      %v372 = vpop.permute.xlu0 %371
      %375 = vset.pattern.permute.xlu0 0
      %376 = vperm.xlu0 %375, %v326
      %v377 = vpop.permute.xlu0 %376
      %380 = vset.pattern.permute.xlu0 0
      %381 = vperm.xlu0 %380, %v327
      %v382 = vpop.permute.xlu0 %381
      %385 = vset.pattern.permute.xlu0 0
      %386 = vperm.xlu0 %385, %v328
      %v387 = vpop.permute.xlu0 %386
      %390 = vset.pattern.permute.xlu0 0
      %391 = vperm.xlu0 %390, %v329
      %v392 = vpop.permute.xlu0 %391
      %395 = vset.pattern.permute.xlu0 0
      %396 = vperm.xlu0 %395, %v330
      %v397 = vpop.permute.xlu0 %396
      %400 = vset.pattern.permute.xlu0 0
      %401 = vperm.xlu0 %400, %v331
      %v402 = vpop.permute.xlu0 %401
      %405 = vset.pattern.permute.xlu0 0
      %406 = vperm.xlu0 %405, %v332
      %v407 = vpop.permute.xlu0 %406
      %410 = vset.pattern.permute.xlu0 0
      %411 = vperm.xlu0 %410, %v333
      %v412 = vpop.permute.xlu0 %411
      %v414 = vmul.f32 %v302, %v337
      %v415 = vmul.f32 %v303, %v342
      %v416 = vmul.f32 %v304, %v347
      %v417 = vmul.f32 %v305, %v352
      %v418 = vmul.f32 %v306, %v357
      %v419 = vmul.f32 %v307, %v362
      %v420 = vmul.f32 %v308, %v367
      %v421 = vmul.f32 %v309, %v372
      %v422 = vmul.f32 %v310, %v377
      %v423 = vmul.f32 %v311, %v382
      %v424 = vmul.f32 %v312, %v387
      %v425 = vmul.f32 %v313, %v392
      %v426 = vmul.f32 %v314, %v397
      %v427 = vmul.f32 %v315, %v402
      %v428 = vmul.f32 %v316, %v407
      %v429 = vmul.f32 %v317, %v412
      %v430 = vld [vmem:[%s2] sm:$0xf]
      %v431 = vld [vmem:[%s2 + $0x4] sm:$0xf]
      %v432 = vld [vmem:[%s2 + $0x8] sm:$0xf]
      %v433 = vld [vmem:[%s2 + $0xc] sm:$0xf]
      %v434 = vld [vmem:[%s2 + $0x10] sm:$0xf]
      %v435 = vld [vmem:[%s2 + $0x14] sm:$0xf]
      %v436 = vld [vmem:[%s2 + $0x18] sm:$0xf]
      %v437 = vld [vmem:[%s2 + $0x1c] sm:$0xf]
      %v438 = vld [vmem:[%s2 + $0x20] sm:$0xf]
      %v439 = vld [vmem:[%s2 + $0x24] sm:$0xf]
      %v440 = vld [vmem:[%s2 + $0x28] sm:$0xf]
      %v441 = vld [vmem:[%s2 + $0x2c] sm:$0xf]
      %v442 = vld [vmem:[%s2 + $0x30] sm:$0xf]
      %v443 = vld [vmem:[%s2 + $0x34] sm:$0xf]
      %v444 = vld [vmem:[%s2 + $0x38] sm:$0xf]
      %v445 = vld [vmem:[%s2 + $0x3c] sm:$0xf]
      %v446 = vpack.c.bf16 %v415, %v414
      %v447 = vpack.c.bf16 %v417, %v416
      %v448 = vpack.c.bf16 %v419, %v418
      %v449 = vpack.c.bf16 %v421, %v420
      %v450 = vpack.c.bf16 %v423, %v422
      %v451 = vpack.c.bf16 %v425, %v424
      %v452 = vpack.c.bf16 %v427, %v426
      %v453 = vpack.c.bf16 %v429, %v428
      %v454 = vld [vmem:[#allocation6] sm:$0xf]
      %v455 = vld [vmem:[#allocation6 + $0x4] sm:$0xf]
      %v456 = vld [vmem:[#allocation6 + $0x8] sm:$0xf]
      %v457 = vld [vmem:[#allocation6 + $0xc] sm:$0xf]
      %v458 = vld [vmem:[#allocation6 + $0x10] sm:$0xf]
      %v459 = vld [vmem:[#allocation6 + $0x14] sm:$0xf]
      %v460 = vld [vmem:[#allocation6 + $0x18] sm:$0xf]
      %v461 = vld [vmem:[#allocation6 + $0x1c] sm:$0xf]
      %v462 = vld [vmem:[#allocation6 + $0x20] sm:$0xf]
      %v463 = vld [vmem:[#allocation6 + $0x24] sm:$0xf]
      %v464 = vld [vmem:[#allocation6 + $0x28] sm:$0xf]
      %v465 = vld [vmem:[#allocation6 + $0x2c] sm:$0xf]
      %v466 = vld [vmem:[#allocation6 + $0x30] sm:$0xf]
      %v467 = vld [vmem:[#allocation6 + $0x34] sm:$0xf]
      %v468 = vld [vmem:[#allocation6 + $0x38] sm:$0xf]
      %v469 = vld [vmem:[#allocation6 + $0x3c] sm:$0xf]
      %v470 = vld [vmem:[#allocation8] sm:$0xf]
      %v471 = vld [vmem:[#allocation8 + $0x4] sm:$0xf]
      %v472 = vld [vmem:[#allocation8 + $0x8] sm:$0xf]
      %v473 = vld [vmem:[#allocation8 + $0xc] sm:$0xf]
      %v474 = vld [vmem:[#allocation8 + $0x10] sm:$0xf]
      %v475 = vld [vmem:[#allocation8 + $0x14] sm:$0xf]
      %v476 = vld [vmem:[#allocation8 + $0x18] sm:$0xf]
      %v477 = vld [vmem:[#allocation8 + $0x1c] sm:$0xf]
      %v478 = vld [vmem:[#allocation8 + $0x20] sm:$0xf]
      %v479 = vld [vmem:[#allocation8 + $0x24] sm:$0xf]
      %v480 = vld [vmem:[#allocation8 + $0x28] sm:$0xf]
      %v481 = vld [vmem:[#allocation8 + $0x2c] sm:$0xf]
      %v482 = vld [vmem:[#allocation8 + $0x30] sm:$0xf]
      %v483 = vld [vmem:[#allocation8 + $0x34] sm:$0xf]
      %v484 = vld [vmem:[#allocation8 + $0x38] sm:$0xf]
      %v485 = vld [vmem:[#allocation8 + $0x3c] sm:$0xf]
      %v502 = vunpack.c.l.b16 %v430
      %v503 = vunpack.c.l.b16 %v431
      %v504 = vunpack.c.l.b16 %v432
      %v505 = vunpack.c.l.b16 %v433
      %v506 = vunpack.c.l.b16 %v434
      %v507 = vunpack.c.l.b16 %v435
      %v508 = vunpack.c.l.b16 %v436
      %v509 = vunpack.c.l.b16 %v437
      %v510 = vunpack.c.l.b16 %v438
      %v511 = vunpack.c.l.b16 %v439
      %v512 = vunpack.c.l.b16 %v440
      %v513 = vunpack.c.l.b16 %v441
      %v514 = vunpack.c.l.b16 %v442
      %v515 = vunpack.c.l.b16 %v443
      %v516 = vunpack.c.l.b16 %v444
      %v517 = vunpack.c.l.b16 %v445
      %v518 = vpack.c.b16 %v503, %v502
      %v519 = vpack.c.b16 %v505, %v504
      %v520 = vpack.c.b16 %v507, %v506
      %v521 = vpack.c.b16 %v509, %v508
      %v522 = vpack.c.b16 %v511, %v510
      %v523 = vpack.c.b16 %v513, %v512
      %v524 = vpack.c.b16 %v515, %v514
      %v525 = vpack.c.b16 %v517, %v516
      %v550 = vunpack.c.l.b16 %v470
      %v551 = vunpack.c.l.b16 %v471
      %v552 = vunpack.c.l.b16 %v472
      %v553 = vunpack.c.l.b16 %v473
      %v554 = vunpack.c.l.b16 %v474
      %v555 = vunpack.c.l.b16 %v475
      %v556 = vunpack.c.l.b16 %v476
      %v557 = vunpack.c.l.b16 %v477
      %v558 = vunpack.c.l.b16 %v478
      %v559 = vunpack.c.l.b16 %v479
      %v560 = vunpack.c.l.b16 %v480
      %v561 = vunpack.c.l.b16 %v481
      %v562 = vunpack.c.l.b16 %v482
      %v563 = vunpack.c.l.b16 %v483
      %v564 = vunpack.c.l.b16 %v484
      %v565 = vunpack.c.l.b16 %v485
      %v566 = vpack.c.b16 %v551, %v550
      %v567 = vpack.c.b16 %v553, %v552
      %v568 = vpack.c.b16 %v555, %v554
      %v569 = vpack.c.b16 %v557, %v556
      %v570 = vpack.c.b16 %v559, %v558
      %v571 = vpack.c.b16 %v561, %v560
      %v572 = vpack.c.b16 %v563, %v562
      %v573 = vpack.c.b16 %v565, %v564
      %582 = vmatpush.bf16.msra.mxu0 %v573
      %583 = vmatpush.bf16.msra.mxu0 %v572
      %584 = vmatpush.bf16.msra.mxu0 %v571
      %585 = vmatpush.bf16.msra.mxu0 %v570
      %586 = vmatpush.bf16.msra.mxu0 %v569
      %587 = vmatpush.bf16.msra.mxu0 %v568
      %588 = vmatpush.bf16.msra.mxu0 %v567
      %589 = vmatpush.bf16.msra.mxu0 %v566
      %590 = vmatmul.bf16.gmra.mxu0 %v518
      %v591 = vpop.f32.mrf.mxu0
      %v592 = vadd.f32 0.0, %v591
      %v593 = vpop.f32.mrf.mxu0
      %v594 = vadd.f32 0.0, %v593
      %595 = vmatmul.bf16.gmra.mxu0 %v519
      %v596 = vpop.f32.mrf.mxu0
      %v597 = vadd.f32 0.0, %v596
      %v598 = vpop.f32.mrf.mxu0
      %v599 = vadd.f32 0.0, %v598
      %600 = vmatmul.bf16.gmra.mxu0 %v520
      %v601 = vpop.f32.mrf.mxu0
      %v602 = vadd.f32 0.0, %v601
      %v603 = vpop.f32.mrf.mxu0
      %v604 = vadd.f32 0.0, %v603
      %605 = vmatmul.bf16.gmra.mxu0 %v521
      %v606 = vpop.f32.mrf.mxu0
      %v607 = vadd.f32 0.0, %v606
      %v608 = vpop.f32.mrf.mxu0
      %v609 = vadd.f32 0.0, %v608
      %610 = vmatmul.bf16.gmra.mxu0 %v522
      %v611 = vpop.f32.mrf.mxu0
      %v612 = vadd.f32 0.0, %v611
      %v613 = vpop.f32.mrf.mxu0
      %v614 = vadd.f32 0.0, %v613
      %615 = vmatmul.bf16.gmra.mxu0 %v523
      %v616 = vpop.f32.mrf.mxu0
      %v617 = vadd.f32 0.0, %v616
      %v618 = vpop.f32.mrf.mxu0
      %v619 = vadd.f32 0.0, %v618
      %620 = vmatmul.bf16.gmra.mxu0 %v524
      %v621 = vpop.f32.mrf.mxu0
      %v622 = vadd.f32 0.0, %v621
      %v623 = vpop.f32.mrf.mxu0
      %v624 = vadd.f32 0.0, %v623
      %625 = vmatmul.bf16.gmra.mxu0 %v525
      %v626 = vpop.f32.mrf.mxu0
      %v627 = vadd.f32 0.0, %v626
      %v628 = vpop.f32.mrf.mxu0
      %v629 = vadd.f32 0.0, %v628
      %630 = vdwg.mxu0
      %v647 = vunpack.c.l.b16 %v454
      %v648 = vunpack.c.l.b16 %v455
      %v649 = vunpack.c.l.b16 %v456
      %v650 = vunpack.c.l.b16 %v457
      %v651 = vunpack.c.l.b16 %v458
      %v652 = vunpack.c.l.b16 %v459
      %v653 = vunpack.c.l.b16 %v460
      %v654 = vunpack.c.l.b16 %v461
      %v655 = vunpack.c.l.b16 %v462
      %v656 = vunpack.c.l.b16 %v463
      %v657 = vunpack.c.l.b16 %v464
      %v658 = vunpack.c.l.b16 %v465
      %v659 = vunpack.c.l.b16 %v466
      %v660 = vunpack.c.l.b16 %v467
      %v661 = vunpack.c.l.b16 %v468
      %v662 = vunpack.c.l.b16 %v469
      %v663 = vpack.c.b16 %v648, %v647
      %v664 = vpack.c.b16 %v650, %v649
      %v665 = vpack.c.b16 %v652, %v651
      %v666 = vpack.c.b16 %v654, %v653
      %v667 = vpack.c.b16 %v656, %v655
      %v668 = vpack.c.b16 %v658, %v657
      %v669 = vpack.c.b16 %v660, %v659
      %v670 = vpack.c.b16 %v662, %v661
      %679 = vmatpush.bf16.msra.mxu0 %v670
      %680 = vmatpush.bf16.msra.mxu0 %v669
      %681 = vmatpush.bf16.msra.mxu0 %v668
      %682 = vmatpush.bf16.msra.mxu0 %v667
      %683 = vmatpush.bf16.msra.mxu0 %v666
      %684 = vmatpush.bf16.msra.mxu0 %v665
      %685 = vmatpush.bf16.msra.mxu0 %v664
      %686 = vmatpush.bf16.msra.mxu0 %v663
      %687 = vmatmul.bf16.gmra.mxu0 %v446
      %v688 = vpop.f32.mrf.mxu0
      %v689 = vadd.f32 %v592, %v688
      %v690 = vpop.f32.mrf.mxu0
      %v691 = vadd.f32 %v594, %v690
      %692 = vmatmul.bf16.gmra.mxu0 %v447
      %v693 = vpop.f32.mrf.mxu0
      %v694 = vadd.f32 %v597, %v693
      %v695 = vpop.f32.mrf.mxu0
      %v696 = vadd.f32 %v599, %v695
      %697 = vmatmul.bf16.gmra.mxu0 %v448
      %v698 = vpop.f32.mrf.mxu0
      %v699 = vadd.f32 %v602, %v698
      %v700 = vpop.f32.mrf.mxu0
      %v701 = vadd.f32 %v604, %v700
      %702 = vmatmul.bf16.gmra.mxu0 %v449
      %v703 = vpop.f32.mrf.mxu0
      %v704 = vadd.f32 %v607, %v703
      %v705 = vpop.f32.mrf.mxu0
      %v706 = vadd.f32 %v609, %v705
      %707 = vmatmul.bf16.gmra.mxu0 %v450
      %v708 = vpop.f32.mrf.mxu0
      %v709 = vadd.f32 %v612, %v708
      %v710 = vpop.f32.mrf.mxu0
      %v711 = vadd.f32 %v614, %v710
      %712 = vmatmul.bf16.gmra.mxu0 %v451
      %v713 = vpop.f32.mrf.mxu0
      %v714 = vadd.f32 %v617, %v713
      %v715 = vpop.f32.mrf.mxu0
      %v716 = vadd.f32 %v619, %v715
      %717 = vmatmul.bf16.gmra.mxu0 %v452
      %v718 = vpop.f32.mrf.mxu0
      %v719 = vadd.f32 %v622, %v718
      %v720 = vpop.f32.mrf.mxu0
      %v721 = vadd.f32 %v624, %v720
      %722 = vmatmul.bf16.gmra.mxu0 %v453
      %v723 = vpop.f32.mrf.mxu0
      %v724 = vadd.f32 %v627, %v723
      %v725 = vpop.f32.mrf.mxu0
      %v726 = vadd.f32 %v629, %v725
      %727 = vdwg.mxu0
      %v728 = vld [vmem:[%s6] sm:$0x1]
      %v730 = vperm.slane %v728, 0
      %v732 = vadd.f32 %v689, %v730
      %v733 = vadd.f32 %v691, %v730
      %v734 = vadd.f32 %v694, %v730
      %v735 = vadd.f32 %v696, %v730
      %v736 = vadd.f32 %v699, %v730
      %v737 = vadd.f32 %v701, %v730
      %v738 = vadd.f32 %v704, %v730
      %v739 = vadd.f32 %v706, %v730
      %v740 = vadd.f32 %v709, %v730
      %v741 = vadd.f32 %v711, %v730
      %v742 = vadd.f32 %v714, %v730
      %v743 = vadd.f32 %v716, %v730
      %v744 = vadd.f32 %v719, %v730
      %v745 = vadd.f32 %v721, %v730
      %v746 = vadd.f32 %v724, %v730
      %v747 = vadd.f32 %v726, %v730
      %v748 = vunpack.c.l.bf16 %v430
      %v749 = vunpack.c.l.bf16 %v431
      %v750 = vunpack.c.l.bf16 %v432
      %v751 = vunpack.c.l.bf16 %v433
      %v752 = vunpack.c.l.bf16 %v434
      %v753 = vunpack.c.l.bf16 %v435
      %v754 = vunpack.c.l.bf16 %v436
      %v755 = vunpack.c.l.bf16 %v437
      %v756 = vunpack.c.l.bf16 %v438
      %v757 = vunpack.c.l.bf16 %v439
      %v758 = vunpack.c.l.bf16 %v440
      %v759 = vunpack.c.l.bf16 %v441
      %v760 = vunpack.c.l.bf16 %v442
      %v761 = vunpack.c.l.bf16 %v443
      %v762 = vunpack.c.l.bf16 %v444
      %v763 = vunpack.c.l.bf16 %v445
      %v764 = vadd.f32 %v732, %v748
      %v765 = vadd.f32 %v733, %v749
      %v766 = vadd.f32 %v734, %v750
      %v767 = vadd.f32 %v735, %v751
      %v768 = vadd.f32 %v736, %v752
      %v769 = vadd.f32 %v737, %v753
      %v770 = vadd.f32 %v738, %v754
      %v771 = vadd.f32 %v739, %v755
      %v772 = vadd.f32 %v740, %v756
      %v773 = vadd.f32 %v741, %v757
      %v774 = vadd.f32 %v742, %v758
      %v775 = vadd.f32 %v743, %v759
      %v776 = vadd.f32 %v744, %v760
      %v777 = vadd.f32 %v745, %v761
      %v778 = vadd.f32 %v746, %v762
      %v779 = vadd.f32 %v747, %v763
      %780 = vst [vmem:[#allocation9] sm:$0xff] %v764
      %781 = vst [vmem:[#allocation9 + $0x8] sm:$0xff] %v765
      %782 = vst [vmem:[#allocation9 + $0x10] sm:$0xff] %v766
      %783 = vst [vmem:[#allocation9 + $0x18] sm:$0xff] %v767
      %784 = vst [vmem:[#allocation9 + $0x20] sm:$0xff] %v768
      %785 = vst [vmem:[#allocation9 + $0x28] sm:$0xff] %v769
      %786 = vst [vmem:[#allocation9 + $0x30] sm:$0xff] %v770
      %787 = vst [vmem:[#allocation9 + $0x38] sm:$0xff] %v771
      %788 = vst [vmem:[#allocation9 + $0x40] sm:$0xff] %v772
      %789 = vst [vmem:[#allocation9 + $0x48] sm:$0xff] %v773
      %790 = vst [vmem:[#allocation9 + $0x50] sm:$0xff] %v774
      %791 = vst [vmem:[#allocation9 + $0x58] sm:$0xff] %v775
      %792 = vst [vmem:[#allocation9 + $0x60] sm:$0xff] %v776
      %793 = vst [vmem:[#allocation9 + $0x68] sm:$0xff] %v777
      %794 = vst [vmem:[#allocation9 + $0x70] sm:$0xff] %v778
      %795 = vst [vmem:[#allocation9 + $0x78] sm:$0xff] %v779
    $region49: #{tpu_custom_call.1} parent=1 // pred_fallthru
      _
    // Predicated region
    $region50: #{tpu_custom_call.1} parent=1 // pred_check
      _
    $region51: #{tpu_custom_call.1} parent=1 // pred_check_branch
      %797 = sbr.rel (0) target = $region53
    $region52: #{tpu_custom_call.1} parent=1 // pred_region
      %799 = vsyncadd [#allocation5], 0
      %s800 = sshll.u32 [#allocation9], 4
      %s801 = int_to_ptr.vmem [resolvable:$true] %s800
      %s802 = sshll.u32 %s7, 4
      %s803 = int_to_ptr.hbm [resolvable:$true] %s802
      %808 = dma.vmem_to_hbm [thread:$0]  %s801, 2048, %s803, [#allocation5], 128, 128, 8
    $region53: #{tpu_custom_call.1} parent=1 // pred_fallthru
      _
    // Predicated region
    $region54: #{tpu_custom_call.1} parent=1 // pred_check
      _
    $region55: #{tpu_custom_call.1} parent=1 // pred_check_branch
      %810 = sbr.rel (0) target = $region57
    $region56: #{tpu_custom_call.1} parent=1 // pred_region
      %812 = dma.done [#allocation5], 2048
    $region57: #{tpu_custom_call.1} parent=1 // pred_fallthru
      _
    %813 = vsyncpa [#allocation4], 1
    %814 = vsyncpa [#allocation7], 1
    %815 = vsyncpa [#allocation5], 1

</llo_original>
